<compile_context>
chip_gen: v5e
topology: v5e:2x2
jax: 0.10.0
libtpu: 0.0.40
codegen_flags: <defaults>
</compile_context>

<pallas_src>
import jax
import jax.numpy as jnp
from jax import lax
from jax.experimental import pallas as pl
from jax.experimental.pallas import tpu as pltpu


def _cdiv(a, b):
    return -(-a // b)


def _vmem_capacity_bytes():
    try:
        return int(pltpu.get_tpu_info().vmem_capacity_bytes)
    except Exception:
        return 64 * 1024 * 1024  # conservative (v7x per-TC physical VMEM)


def _laplace_l2_kernel(x_ref, out_ref):
    # x_ref block: (D, H, W, TILE_N) in the input's native dtype.
    D, H, W, TN = x_ref.shape

    def plane(d):
        # Load one (H, W, TILE_N) depth plane and cast it to f32 exactly once.
        return x_ref[d].astype(jnp.float32)

    def body(d, carry):
        acc, prev, cur = carry
        nxt = plane(d + 1)
        c = cur[1:H - 1, 1:W - 1, :]
        lap = (-6.0 * c
               + cur[1:H - 1, 2:W, :]        # +w neighbor
               + cur[1:H - 1, 0:W - 2, :]    # -w neighbor
               + cur[2:H, 1:W - 1, :]        # +h neighbor
               + cur[0:H - 2, 1:W - 1, :]    # -h neighbor
               + nxt[1:H - 1, 1:W - 1, :]    # +d neighbor
               + prev[1:H - 1, 1:W - 1, :])  # -d neighbor
        # Square and reduce over the H-2 axis (third-minor -> plain VPU adds);
        # the accumulator stays a small (W-2, TILE_N) f32 tile.
        acc = acc + jnp.sum(lap * lap, axis=0)
        return acc, cur, nxt

    acc0 = jnp.zeros((W - 2, TN), jnp.float32)
    acc, _, _ = lax.fori_loop(1, D - 1, body, (acc0, plane(0), plane(1)),
                              unroll=True)

    # Single cross-sublane reduce per block (XLU has plenty of slack here).
    total = jnp.sum(acc, axis=0)                             # (TILE_N,)
    rows = lax.broadcasted_iota(jnp.int32, (8, TN), 0)
    # Lane-dense, sublane-aligned (8, TILE_N) partial block: row 0 carries the
    # per-channel partial sums, rows 1..7 are zero.
    out_ref[...] = jnp.where(rows == 0, total[None, :], 0.0)


def laplace_l2_3d(x):
    """x: (ic, oc, k1, k2, k3) array -> scalar float32 (mean(lap(x)^2) / 2)."""
    ic, oc, k1, k2, k3 = x.shape
    if min(k1, k2, k3) < 3:
        raise ValueError(
            "LaplaceL23d needs all spatial dims >= 3 (valid 3x3x3 conv); got "
            f"({k1}, {k2}, {k3}).")

    N = ic * oc
    D, H, W = k1, k2, k3

    # Small-N fallback: <128 channels means >90% lane padding, a 1-step grid,
    # and transpose/pad/launch overhead dominating -> one XLA fusion is faster.
    if N < 128:
        return _reference(x)

    # Channels-last re-layout: (D, H, W, N).  NOTE: if the caller can provide
    # the weight channels-last already, this full HBM read+write disappears.
    xt = jnp.transpose(x.reshape(N, D, H, W), (1, 2, 3, 0))

    in_itemsize = jnp.dtype(x.dtype).itemsize
    vmem_cap = _vmem_capacity_bytes()
    # Per-step footprint budget: generous on 128-MiB parts (v5e/v6e), capped so
    # v7x (64 MiB physical) keeps headroom.
    step_budget = min(int(vmem_cap * 0.55), 48 * 1024 * 1024)

    # Per 128 channel-lanes, per grid step:
    #   * double-buffered input DMA in the NATIVE dtype,
    #   * in-kernel f32 working set: 3 carried planes + a few plane-sized
    #     stencil temporaries + the tiny accumulator (counted as 8 f32 planes),
    #   * double-buffered (8, 128) f32 output block.
    bytes_per_128 = (2 * D * H * W * 128 * in_itemsize
                     + 8 * H * W * 128 * 4
                     + 2 * 8 * 128 * 4)
    max_tiles = max(1, step_budget // bytes_per_128)

    lane_tiles = _cdiv(N, 128)
    if lane_tiles > 1:
        # Keep >= 2 grid steps: enables DMA/compute pipelining and lets the
        # second TensorCore (v7x) pick up work on the "parallel" axis.
        tiles_per_block = max(1, min(max_tiles, _cdiv(lane_tiles, 2)))
    else:
        tiles_per_block = 1
    tile_n = 128 * tiles_per_block

    n_pad = _cdiv(N, tile_n) * tile_n
    if n_pad != N:
        # Zero-padded channels contribute exactly 0 to the sum of squares.
        xt = jnp.pad(xt, ((0, 0), (0, 0), (0, 0), (0, n_pad - N)))
    num_blocks = n_pad // tile_n

    # Derive vmem_limit_bytes from the actual per-step footprint (+50% slack),
    # clamped to the chip's physical capacity.
    step_bytes = (2 * D * H * W * tile_n * in_itemsize
                  + 8 * H * W * tile_n * 4
                  + 2 * 8 * tile_n * 4)
    cap_limit = max(32 * 1024 * 1024,
                    min(100 * 1024 * 1024, vmem_cap - 8 * 1024 * 1024))
    vmem_limit = min(max(32 * 1024 * 1024, int(step_bytes * 1.5)), cap_limit)

    partials = pl.pallas_call(
        _laplace_l2_kernel,
        out_shape=jax.ShapeDtypeStruct((num_blocks * 8, tile_n), jnp.float32),
        grid_spec=pltpu.PrefetchScalarGridSpec(
            num_scalar_prefetch=0,
            grid=(num_blocks,),
            in_specs=[pl.BlockSpec((D, H, W, tile_n),
                                   lambda n: (0, 0, 0, n))],
            out_specs=pl.BlockSpec((8, tile_n), lambda n: (n, 0)),
        ),
        compiler_params=pltpu.CompilerParams(
            dimension_semantics=("parallel",),
            vmem_limit_bytes=vmem_limit,
        ),
    )(xt)

    # Final tiny reduction + normalization outside the kernel.
    n_elems = N * (D - 2) * (H - 2) * (W - 2)
    return jnp.sum(partials) / jnp.float32(n_elems) / jnp.float32(2.0)


def _reference(x):
    """Pure-JAX reference (same math as F.conv3d with the Laplacian filter)."""
    ic, oc, k1, k2, k3 = x.shape
    v = x.reshape(ic * oc, k1, k2, k3).astype(jnp.float32)
    c = v[:, 1:-1, 1:-1, 1:-1]
    lap = (-6.0 * c
           + v[:, 1:-1, 1:-1, 2:] + v[:, 1:-1, 1:-1, :-2]
           + v[:, 1:-1, 2:, 1:-1] + v[:, 1:-1, :-2, 1:-1]
           + v[:, 2:, 1:-1, 1:-1] + v[:, :-2, 1:-1, 1:-1])
    return jnp.mean(lap * lap) / 2.0


if __name__ == "__main__":
    key = jax.random.PRNGKey(0)
    # 3D conv-weight-like tensor: (in_ch, out_ch, k1, k2, k3).
    # N = ic*oc = 256 >= 128 exercises the Pallas path with a 2-step grid.
    ic, oc, k1, k2, k3 = 16, 16, 5, 5, 5
    x = jax.random.normal(key, (ic, oc, k1, k2, k3), dtype=jnp.float32)

    result = laplace_l2_3d(x)
    jax.block_until_ready(result)
    ref = _reference(x)
    assert jnp.allclose(result, ref, rtol=1e-4, atol=1e-5), (result, ref)

    # Small-channel fallback path (pure-JAX) is also checked.
    x_small = jax.random.normal(jax.random.PRNGKey(1), (2, 4, 3, 5, 5),
                                dtype=jnp.float32)
    r_small = laplace_l2_3d(x_small)
    jax.block_until_ready(r_small)
    assert jnp.allclose(r_small, _reference(x_small), rtol=1e-4, atol=1e-5)

    print("KERNEL_OK")
</pallas_src>

<mosaic_0001>
module attributes {stable_mosaic.version = 11 : i64} {
  func.func @_laplace_l2_kernel(%arg0: i32, %arg1: memref<5x5x5x128xf32, #tpu.memory_space<vmem>>, %arg2: memref<8x128xf32, #tpu.memory_space<vmem>>) attributes {dimension_semantics = [#tpu.dimension_semantics<parallel>], iteration_bounds = array<i64: 2>, scalar_prefetch = 0 : i64, scratch_operands = 0 : i64, tpu.core_type = #tpu.core_type<tc>, window_params = [{transform_indices = @transform_0, window_bounds = array<i64: 5, 5, 5, 128>}, {transform_indices = @transform_1, window_bounds = array<i64: 8, 128>}]} {
    %cst = arith.constant 0.000000e+00 : f32
    %0 = vector.broadcast %cst : f32 to vector<3x128xf32>
    %c0 = arith.constant 0 : index
    %c0_0 = arith.constant 0 : index
    %c0_1 = arith.constant 0 : index
    %c0_2 = arith.constant 0 : index
    %1 = vector.load %arg1[%c0, %c0_0, %c0_1, %c0_2] : memref<5x5x5x128xf32, #tpu.memory_space<vmem>>, vector<1x5x5x128xf32>
    %2 = vector.shape_cast %1 : vector<1x5x5x128xf32> to vector<5x5x128xf32>
    %c1 = arith.constant 1 : index
    %c0_3 = arith.constant 0 : index
    %c0_4 = arith.constant 0 : index
    %c0_5 = arith.constant 0 : index
    %3 = vector.load %arg1[%c1, %c0_3, %c0_4, %c0_5] : memref<5x5x5x128xf32, #tpu.memory_space<vmem>>, vector<1x5x5x128xf32>
    %4 = vector.shape_cast %3 : vector<1x5x5x128xf32> to vector<5x5x128xf32>
    %c1_i32 = arith.constant 1 : i32
    %c1_i32_6 = arith.constant 1 : i32
    %5 = arith.addi %c1_i32, %c1_i32_6 : i32
    %6 = arith.index_cast %5 : i32 to index
    %c0_7 = arith.constant 0 : index
    %c0_8 = arith.constant 0 : index
    %c0_9 = arith.constant 0 : index
    %7 = vector.load %arg1[%6, %c0_7, %c0_8, %c0_9] : memref<5x5x5x128xf32, #tpu.memory_space<vmem>>, vector<1x5x5x128xf32>
    %8 = vector.shape_cast %7 : vector<1x5x5x128xf32> to vector<5x5x128xf32>
    %9 = vector.extract_strided_slice %4 {offsets = [1, 1, 0], sizes = [3, 3, 128], strides = [1, 1, 1]} : vector<5x5x128xf32> to vector<3x3x128xf32>
    %cst_10 = arith.constant -6.000000e+00 : f32
    %10 = vector.broadcast %cst_10 : f32 to vector<3x3x128xf32>
    %11 = arith.mulf %10, %9 : vector<3x3x128xf32>
    %12 = vector.extract_strided_slice %4 {offsets = [1, 2, 0], sizes = [3, 3, 128], strides = [1, 1, 1]} : vector<5x5x128xf32> to vector<3x3x128xf32>
    %13 = arith.addf %11, %12 : vector<3x3x128xf32>
    %14 = vector.extract_strided_slice %4 {offsets = [1, 0, 0], sizes = [3, 3, 128], strides = [1, 1, 1]} : vector<5x5x128xf32> to vector<3x3x128xf32>
    %15 = arith.addf %13, %14 : vector<3x3x128xf32>
    %16 = vector.extract_strided_slice %4 {offsets = [2, 1, 0], sizes = [3, 3, 128], strides = [1, 1, 1]} : vector<5x5x128xf32> to vector<3x3x128xf32>
    %17 = arith.addf %15, %16 : vector<3x3x128xf32>
    %18 = vector.extract_strided_slice %4 {offsets = [0, 1, 0], sizes = [3, 3, 128], strides = [1, 1, 1]} : vector<5x5x128xf32> to vector<3x3x128xf32>
    %19 = arith.addf %17, %18 : vector<3x3x128xf32>
    %20 = vector.extract_strided_slice %8 {offsets = [1, 1, 0], sizes = [3, 3, 128], strides = [1, 1, 1]} : vector<5x5x128xf32> to vector<3x3x128xf32>
    %21 = arith.addf %19, %20 : vector<3x3x128xf32>
    %22 = vector.extract_strided_slice %2 {offsets = [1, 1, 0], sizes = [3, 3, 128], strides = [1, 1, 1]} : vector<5x5x128xf32> to vector<3x3x128xf32>
    %23 = arith.addf %21, %22 : vector<3x3x128xf32>
    %24 = arith.mulf %23, %23 : vector<3x3x128xf32>
    %cst_11 = arith.constant dense<0.000000e+00> : vector<3x128xf32>
    %25 = vector.multi_reduction <add>, %24, %cst_11 [0] : vector<3x3x128xf32> to vector<3x128xf32>
    %26 = arith.addf %0, %25 : vector<3x128xf32>
    %c2_i32 = arith.constant 2 : i32
    %c1_i32_12 = arith.constant 1 : i32
    %27 = arith.addi %c2_i32, %c1_i32_12 : i32
    %28 = arith.index_cast %27 : i32 to index
    %c0_13 = arith.constant 0 : index
    %c0_14 = arith.constant 0 : index
    %c0_15 = arith.constant 0 : index
    %29 = vector.load %arg1[%28, %c0_13, %c0_14, %c0_15] : memref<5x5x5x128xf32, #tpu.memory_space<vmem>>, vector<1x5x5x128xf32>
    %30 = vector.shape_cast %29 : vector<1x5x5x128xf32> to vector<5x5x128xf32>
    %31 = vector.extract_strided_slice %8 {offsets = [1, 1, 0], sizes = [3, 3, 128], strides = [1, 1, 1]} : vector<5x5x128xf32> to vector<3x3x128xf32>
    %cst_16 = arith.constant -6.000000e+00 : f32
    %32 = vector.broadcast %cst_16 : f32 to vector<3x3x128xf32>
    %33 = arith.mulf %32, %31 : vector<3x3x128xf32>
    %34 = vector.extract_strided_slice %8 {offsets = [1, 2, 0], sizes = [3, 3, 128], strides = [1, 1, 1]} : vector<5x5x128xf32> to vector<3x3x128xf32>
    %35 = arith.addf %33, %34 : vector<3x3x128xf32>
    %36 = vector.extract_strided_slice %8 {offsets = [1, 0, 0], sizes = [3, 3, 128], strides = [1, 1, 1]} : vector<5x5x128xf32> to vector<3x3x128xf32>
    %37 = arith.addf %35, %36 : vector<3x3x128xf32>
    %38 = vector.extract_strided_slice %8 {offsets = [2, 1, 0], sizes = [3, 3, 128], strides = [1, 1, 1]} : vector<5x5x128xf32> to vector<3x3x128xf32>
    %39 = arith.addf %37, %38 : vector<3x3x128xf32>
    %40 = vector.extract_strided_slice %8 {offsets = [0, 1, 0], sizes = [3, 3, 128], strides = [1, 1, 1]} : vector<5x5x128xf32> to vector<3x3x128xf32>
    %41 = arith.addf %39, %40 : vector<3x3x128xf32>
    %42 = vector.extract_strided_slice %30 {offsets = [1, 1, 0], sizes = [3, 3, 128], strides = [1, 1, 1]} : vector<5x5x128xf32> to vector<3x3x128xf32>
    %43 = arith.addf %41, %42 : vector<3x3x128xf32>
    %44 = vector.extract_strided_slice %4 {offsets = [1, 1, 0], sizes = [3, 3, 128], strides = [1, 1, 1]} : vector<5x5x128xf32> to vector<3x3x128xf32>
    %45 = arith.addf %43, %44 : vector<3x3x128xf32>
    %46 = arith.mulf %45, %45 : vector<3x3x128xf32>
    %cst_17 = arith.constant dense<0.000000e+00> : vector<3x128xf32>
    %47 = vector.multi_reduction <add>, %46, %cst_17 [0] : vector<3x3x128xf32> to vector<3x128xf32>
    %48 = arith.addf %26, %47 : vector<3x128xf32>
    %c3_i32 = arith.constant 3 : i32
    %c1_i32_18 = arith.constant 1 : i32
    %49 = arith.addi %c3_i32, %c1_i32_18 : i32
    %50 = arith.index_cast %49 : i32 to index
    %c0_19 = arith.constant 0 : index
    %c0_20 = arith.constant 0 : index
    %c0_21 = arith.constant 0 : index
    %51 = vector.load %arg1[%50, %c0_19, %c0_20, %c0_21] : memref<5x5x5x128xf32, #tpu.memory_space<vmem>>, vector<1x5x5x128xf32>
    %52 = vector.shape_cast %51 : vector<1x5x5x128xf32> to vector<5x5x128xf32>
    %53 = vector.extract_strided_slice %30 {offsets = [1, 1, 0], sizes = [3, 3, 128], strides = [1, 1, 1]} : vector<5x5x128xf32> to vector<3x3x128xf32>
    %cst_22 = arith.constant -6.000000e+00 : f32
    %54 = vector.broadcast %cst_22 : f32 to vector<3x3x128xf32>
    %55 = arith.mulf %54, %53 : vector<3x3x128xf32>
    %56 = vector.extract_strided_slice %30 {offsets = [1, 2, 0], sizes = [3, 3, 128], strides = [1, 1, 1]} : vector<5x5x128xf32> to vector<3x3x128xf32>
    %57 = arith.addf %55, %56 : vector<3x3x128xf32>
    %58 = vector.extract_strided_slice %30 {offsets = [1, 0, 0], sizes = [3, 3, 128], strides = [1, 1, 1]} : vector<5x5x128xf32> to vector<3x3x128xf32>
    %59 = arith.addf %57, %58 : vector<3x3x128xf32>
    %60 = vector.extract_strided_slice %30 {offsets = [2, 1, 0], sizes = [3, 3, 128], strides = [1, 1, 1]} : vector<5x5x128xf32> to vector<3x3x128xf32>
    %61 = arith.addf %59, %60 : vector<3x3x128xf32>
    %62 = vector.extract_strided_slice %30 {offsets = [0, 1, 0], sizes = [3, 3, 128], strides = [1, 1, 1]} : vector<5x5x128xf32> to vector<3x3x128xf32>
    %63 = arith.addf %61, %62 : vector<3x3x128xf32>
    %64 = vector.extract_strided_slice %52 {offsets = [1, 1, 0], sizes = [3, 3, 128], strides = [1, 1, 1]} : vector<5x5x128xf32> to vector<3x3x128xf32>
    %65 = arith.addf %63, %64 : vector<3x3x128xf32>
    %66 = vector.extract_strided_slice %8 {offsets = [1, 1, 0], sizes = [3, 3, 128], strides = [1, 1, 1]} : vector<5x5x128xf32> to vector<3x3x128xf32>
    %67 = arith.addf %65, %66 : vector<3x3x128xf32>
    %68 = arith.mulf %67, %67 : vector<3x3x128xf32>
    %cst_23 = arith.constant dense<0.000000e+00> : vector<3x128xf32>
    %69 = vector.multi_reduction <add>, %68, %cst_23 [0] : vector<3x3x128xf32> to vector<3x128xf32>
    %70 = arith.addf %48, %69 : vector<3x128xf32>
    %c3_i32_24 = arith.constant 3 : i32
    %cst_25 = arith.constant dense<0.000000e+00> : vector<128xf32>
    %71 = vector.multi_reduction <add>, %70, %cst_25 [0] : vector<3x128xf32> to vector<128xf32>
    %72 = tpu.iota {dimensions = array<i32: 0>} : vector<8x128xi32>
    %c0_i32 = arith.constant 0 : i32
    %73 = vector.broadcast %c0_i32 : i32 to vector<8x128xi32>
    %74 = arith.cmpi eq, %72, %73 : vector<8x128xi32>
    %75 = vector.shape_cast %71 : vector<128xf32> to vector<1x128xf32>
    %cst_26 = arith.constant 0.000000e+00 : f32
    %76 = vector.shape_cast %75 : vector<1x128xf32> to vector<1x128xf32>
    %77 = vector.broadcast %76 : vector<1x128xf32> to vector<8x128xf32>
    %78 = vector.broadcast %cst_26 : f32 to vector<8x128xf32>
    %79 = arith.select %74, %77, %78 : vector<8x128xi1>, vector<8x128xf32>
    %c0_27 = arith.constant 0 : index
    %c0_28 = arith.constant 0 : index
    %80 = vector.load %arg2[%c0_27, %c0_28] : memref<8x128xf32, #tpu.memory_space<vmem>>, vector<8x128xf32>
    tpu.vector_store %arg2[%c0_27, %c0_28], %79 {strides = array<i32>} : memref<8x128xf32, #tpu.memory_space<vmem>>, vector<8x128xf32>,
    return
  }
  func.func @transform_0(%arg0: i32) -> (i32, i32, i32, i32) {
    %c0_i32 = arith.constant 0 : i32
    %c0_i32_0 = arith.constant 0 : i32
    %c0_i32_1 = arith.constant 0 : i32
    %c0_i32_2 = arith.constant 0 : i32
    return %c0_i32, %c0_i32_0, %c0_i32_1, %arg0 : i32, i32, i32, i32
  }
  func.func @transform_1(%arg0: i32) -> (i32, i32) {
    %c0_i32 = arith.constant 0 : i32
    %c0_i32_0 = arith.constant 0 : i32
    return %arg0, %c0_i32 : i32, i32
  }
}

</mosaic_0001>

<llo_original>
// kernel: tpu_custom_call.1
$region0: #{tpu_custom_call.1}
  #allocation0 [shape = 'u32[]', space=smem, size = 0x4, offset = 0x4, fixed_abs, tag = 'smem constant byte address 0x4 - core index']
  #allocation1 [shape = 'u32[72,128]{1,0:T(1,128)}', space=vmem, size = 0x9000, scoped, tag = 'internal scratch']
  %s0 = inlined_call_operand.hbm [shape: f32[5,5,5,256], index: 0, kind: input, shape index: {}]
  %s1 = inlined_call_operand.hbm [shape: f32[16,128], index: 1, kind: output, shape index: {}]
  %s2 = sld [smem:[#allocation0]]
  $region41: #{tpu_custom_call.1} parent=0
    _
  %s4 = ssub.s32 1, %s2
  %s5 = scalar_select 0, %s4, %s2
  $region1: #{tpu_custom_call.1} parent=0
    #allocation2 [shape = 'u8[204800]{0}', space=vmem, size = 0x32000, scoped, tag = 'input window, operand 0']
    #allocation3 [shape = 's32[2]{0}', space=sflag, size = 0x8, scoped, tag = 'scoped memory for tpu_custom_call.1']
    #allocation4 [shape = 's32[2]{0}', space=sflag, size = 0x8, scoped, tag = 'scoped memory for tpu_custom_call.1']
    #allocation5 [shape = 'u8[8192]{0}', space=vmem, size = 0x2000, scoped, tag = 'output window, operand 0']
    %6 = vsyncpa [#allocation3], 0
    %s7 = scalar_lea.sflag [#allocation3], 1
    %8 = vsyncpa %s7, 0
    %9 = vsyncpa [#allocation4], 0
    %s10 = scalar_lea.sflag [#allocation4], 1
    %11 = vsyncpa %s10, 0
    loop: start=0, step=1, limit=4
    $region2: #{tpu_custom_call.1} parent=1 // loop_pre_header
      _
    $region3: #{tpu_custom_call.1} parent=1 // loop_header
      %s13 = sphi 0, %s17
      %p14 = scmp.ge.s32.totalorder %s13, 4
      %s23 = sphi 0, %s25
      %s26 = sphi 0, %s23
      %s27 = sphi 0, %s26
      %s43 = sphi 0, %s27
      %s49 = sphi 0, %s51
      %s52 = sphi 0, %s49
      %s53 = sphi 0, %s52
      %s69 = sphi 0, %s53
    $region4: #{tpu_custom_call.1} parent=1 // loop_header_branch
      %16 = sbr.rel (%p14) target = $region8
    $region5: #{tpu_custom_call.1} parent=1 // loop_body
      %s18 = ssub.s32 %s13, 1
      %s19 = ssub.s32 %s13, 2
      %s20 = sadd.s32 %s13, 1
      %s21 = ssub.s32 %s13, %s20
      %p22 = scmp.eq.s32.totalorder %s21, 0
      %s24 = sadd.s32 %s23, 1
      %s25 = scalar_select %p22, %s23, %s24
      %p28 = pneg %p22
      %p29 = scmp.eq.s32.totalorder %s13, 1
      %p30 = por %p28, %p29
      %p31 = scmp.ne.s32.totalorder %s23, %s26
      %p32 = scmp.eq.s32.totalorder %s13, 0
      %p33 = por %p31, %p32
      %p34 = scmp.ne.s32.totalorder %s23, %s26
      %p35 = scmp.eq.s32.totalorder %s18, 1
      %p36 = por %p34, %p35
      %p37 = scmp.ne.s32.totalorder %s26, %s27
      %p38 = scmp.eq.s32.totalorder %s18, 0
      %p39 = por %p37, %p38
      %p40 = scmp.ne.s32.totalorder %s26, %s27
      %p41 = scmp.eq.s32.totalorder %s19, 1
      %p42 = por %p40, %p41
      %p44 = scmp.ne.s32.totalorder %s27, %s43
      %p45 = scmp.eq.s32.totalorder %s19, 0
      %p46 = por %p44, %p45
      %s47 = ssub.s32 %s13, %s20
      %p48 = scmp.eq.s32.totalorder %s47, 0
      %s50 = sadd.s32 %s49, 1
      %s51 = scalar_select %p48, %s49, %s50
      %p54 = pneg %p48
      %p55 = scmp.eq.s32.totalorder %s13, 1
      %p56 = por %p54, %p55
      %p57 = scmp.ne.s32.totalorder %s49, %s52
      %p58 = scmp.eq.s32.totalorder %s13, 0
      %p59 = por %p57, %p58
      %p60 = scmp.ne.s32.totalorder %s49, %s52
      %p61 = scmp.eq.s32.totalorder %s18, 1
      %p62 = por %p60, %p61
      %p63 = scmp.ne.s32.totalorder %s52, %s53
      %p64 = scmp.eq.s32.totalorder %s18, 0
      %p65 = por %p63, %p64
      %p66 = scmp.ne.s32.totalorder %s52, %s53
      %p67 = scmp.eq.s32.totalorder %s19, 1
      %p68 = por %p66, %p67
      %p70 = scmp.ne.s32.totalorder %s53, %s69
      %p71 = scmp.eq.s32.totalorder %s19, 0
      %p72 = por %p70, %p71
      %p73 = scmp.le.s32.totalorder 1, %s13
      %p74 = scmp.lt.s32.totalorder %s13, 3
      %p75 = pnand %p73, %p74
      %p76 = pneg %p75
      // Predicated region
      $region9: #{tpu_custom_call.1} parent=5 // pred_check
        _
      $region10: #{tpu_custom_call.1} parent=5 // pred_check_branch
        %78 = sbr.rel (%p75) target = $region12
      $region11: #{tpu_custom_call.1} parent=5 // pred_region
        %s79 = ssub.s32 %s13, 1
      $region12: #{tpu_custom_call.1} parent=5 // pred_fallthru
        _
      %p80 = scmp.lt.s32.totalorder %s13, 2
      // Predicated region
      $region13: #{tpu_custom_call.1} parent=5 // pred_check
        %p81 = pneg %p80
      $region14: #{tpu_custom_call.1} parent=5 // pred_check_branch
        %83 = sbr.rel (%p81) target = $region16
      $region15: #{tpu_custom_call.1} parent=5 // pred_region
        // Predicated region
        $region17: #{tpu_custom_call.1} parent=15 // pred_check
          %p84 = pneg %p33
        $region18: #{tpu_custom_call.1} parent=15 // pred_check_branch
          %86 = sbr.rel (%p84) target = $region20
        $region19: #{tpu_custom_call.1} parent=15 // pred_region
          %s87 = sand.u32 %s23, 1
          %s88 = scalar_lea.sflag [#allocation3], %s87
          %s89 = sand.u32 %s23, 1
          %s90 = smul.addr %s89, 200
          %s91 = scalar_lea.vmem [#allocation2], %s90
          %93 = vsyncadd %s88, 0
          %s94 = smul.addr %s13, 8
          %s95 = scalar_lea.hbm %s0, %s94
          %s96 = sshll.u32 %s95, 4
          %s97 = int_to_ptr.hbm [resolvable:$true] %s96
          %s98 = sshll.u32 %s91, 4
          %s99 = int_to_ptr.vmem [resolvable:$true] %s98
          %104 = dma.hbm_to_vmem [thread:$0]  %s97, 3200, %s99, %s88, 256, 128, 8
        $region20: #{tpu_custom_call.1} parent=15 // pred_fallthru
          _
      $region16: #{tpu_custom_call.1} parent=5 // pred_fallthru
        _
      %p105 = scmp.le.s32.totalorder 1, %s13
      %p106 = scmp.lt.s32.totalorder %s13, 3
      %p107 = pnand %p105, %p106
      %p108 = pneg %p107
      // Predicated region
      $region21: #{tpu_custom_call.1} parent=5 // pred_check
        _
      $region22: #{tpu_custom_call.1} parent=5 // pred_check_branch
        %110 = sbr.rel (%p107) target = $region24
      $region23: #{tpu_custom_call.1} parent=5 // pred_region
        %s111 = ssub.s32 %s13, 1
        %s112 = sand.u32 %s26, 1
        %s113 = scalar_lea.sflag [#allocation3], %s112
        %s114 = sand.u32 %s26, 1
        %s115 = smul.addr %s114, 200
        %s116 = scalar_lea.vmem [#allocation2], %s115
        // Predicated region
        $region25: #{tpu_custom_call.1} parent=23 // pred_check
          %p117 = pneg %p39
        $region26: #{tpu_custom_call.1} parent=23 // pred_check_branch
          %119 = sbr.rel (%p117) target = $region28
        $region27: #{tpu_custom_call.1} parent=23 // pred_region
          %121 = dma.done %s113, 3200
        $region28: #{tpu_custom_call.1} parent=23 // pred_fallthru
          _
        %s122 = sand.u32 %s26, 1
        %s123 = scalar_lea.sflag [#allocation3], %s122
        %s124 = sand.u32 %s26, 1
        %s125 = smul.addr %s124, 200
        %s126 = scalar_lea.vmem [#allocation2], %s125
        %p127 = pneg %p39
        %p128 = pneg %p36
        %p129 = pneg %p65
        %p130 = pneg %p62
        %s131 = sand.u32 %s52, 1
        %s132 = scalar_lea.sflag [#allocation4], %s131
        %s133 = sand.u32 %s52, 1
        %s134 = smul.addr %s133, 8
        %s135 = scalar_lea.vmem [#allocation5], %s134
        %v136 = vld [vmem:[%s116 + $0x8] sm:$0x1f]
        %v137 = vld [vmem:[%s116 + $0x10] sm:$0x1f]
        %v138 = vld [vmem:[%s116 + $0x18] sm:$0x1f]
        %s139 = scalar_lea.vmem %s116, 40 [#allocation2]
        %v140 = vld [vmem:[%s139] sm:$0x1f]
        %v141 = vld [vmem:[%s139 + $0x8] sm:$0x1f]
        %v142 = vld [vmem:[%s139 + $0x10] sm:$0x1f]
        %v143 = vld [vmem:[%s139 + $0x18] sm:$0x1f]
        %v144 = vld [vmem:[%s139 + $0x20] sm:$0x1f]
        %s145 = scalar_lea.vmem %s116, 80 [#allocation2]
        %v146 = vld [vmem:[%s145] sm:$0x1f]
        %v147 = vld [vmem:[%s145 + $0x8] sm:$0x1f]
        %v148 = vld [vmem:[%s145 + $0x10] sm:$0x1f]
        %v149 = vld [vmem:[%s145 + $0x18] sm:$0x1f]
        %v150 = vld [vmem:[%s145 + $0x20] sm:$0x1f]
        %v151 = vmul.f32 %v141, -6.0
        %v152 = vmul.f32 %v142, -6.0
        %v153 = vmul.f32 %v143, -6.0
        %v157 = vrot.slane %v141, 1
        %v158 = vrot.slane %v142, 1
        %v159 = vrot.slane %v143, 1
        %v163 = vadd.f32 %v151, %v157
        %v164 = vadd.f32 %v152, %v158
        %v165 = vadd.f32 %v153, %v159
        %v166 = vrot.slane %v141, 7
        %v167 = vrot.slane %v142, 7
        %v168 = vrot.slane %v143, 7
        %v172 = vadd.f32 %v163, %v166
        %v173 = vadd.f32 %v164, %v167
        %v174 = vadd.f32 %v165, %v168
        %v175 = vadd.f32 %v172, %v142
        %v176 = vadd.f32 %v173, %v143
        %v177 = vadd.f32 %v174, %v144
        %v178 = vadd.f32 %v175, %v140
        %v179 = vadd.f32 %v176, %v141
        %v180 = vadd.f32 %v177, %v142
        %v181 = vadd.f32 %v178, %v147
        %v182 = vadd.f32 %v179, %v148
        %v183 = vadd.f32 %v180, %v149
        %v184 = vadd.f32 %v181, %v136
        %v185 = vadd.f32 %v182, %v137
        %v186 = vadd.f32 %v183, %v138
        %v187 = vmul.f32 %v184, %v184
        %v188 = vmul.f32 %v185, %v185
        %v189 = vmul.f32 %v186, %v186
        %vm190 = vcmask 1043457
        %v191 = vsel %vm190, %v187, 0.0
        %v192 = vsel %vm190, %v188, 0.0
        %v193 = vadd.f32 %v191, %v192
        %v194 = vsel %vm190, %v189, 0.0
        %v195 = vadd.f32 %v193, %v194
        %v196 = vadd.f32 %v195, 0.0
        %s197 = scalar_lea.vmem %s116, 120 [#allocation2]
        %v198 = vld [vmem:[%s197] sm:$0x1f]
        %v199 = vld [vmem:[%s197 + $0x8] sm:$0x1f]
        %v200 = vld [vmem:[%s197 + $0x10] sm:$0x1f]
        %v201 = vld [vmem:[%s197 + $0x18] sm:$0x1f]
        %v202 = vld [vmem:[%s197 + $0x20] sm:$0x1f]
        %v203 = vmul.f32 %v147, -6.0
        %v204 = vmul.f32 %v148, -6.0
        %v205 = vmul.f32 %v149, -6.0
        %v209 = vrot.slane %v147, 1
        %v210 = vrot.slane %v148, 1
        %v211 = vrot.slane %v149, 1
        %v215 = vadd.f32 %v203, %v209
        %v216 = vadd.f32 %v204, %v210
        %v217 = vadd.f32 %v205, %v211
        %v218 = vrot.slane %v147, 7
        %v219 = vrot.slane %v148, 7
        %v220 = vrot.slane %v149, 7
        %v224 = vadd.f32 %v215, %v218
        %v225 = vadd.f32 %v216, %v219
        %v226 = vadd.f32 %v217, %v220
        %v227 = vadd.f32 %v224, %v148
        %v228 = vadd.f32 %v225, %v149
        %v229 = vadd.f32 %v226, %v150
        %v230 = vadd.f32 %v227, %v146
        %v231 = vadd.f32 %v228, %v147
        %v232 = vadd.f32 %v229, %v148
        %v233 = vadd.f32 %v230, %v199
        %v234 = vadd.f32 %v231, %v200
        %v235 = vadd.f32 %v232, %v201
        %v236 = vadd.f32 %v233, %v141
        %v237 = vadd.f32 %v234, %v142
        %v238 = vadd.f32 %v235, %v143
        %v239 = vmul.f32 %v236, %v236
        %v240 = vmul.f32 %v237, %v237
        %v241 = vmul.f32 %v238, %v238
        %v242 = vsel %vm190, %v239, 0.0
        %v243 = vsel %vm190, %v240, 0.0
        %v244 = vadd.f32 %v242, %v243
        %v245 = vsel %vm190, %v241, 0.0
        %v246 = vadd.f32 %v244, %v245
        %v247 = vadd.f32 %v196, %v246
        %s248 = scalar_lea.vmem %s116, 160 [#allocation2]
        %v249 = vld [vmem:[%s248 + $0x8] sm:$0x1f]
        %v250 = vld [vmem:[%s248 + $0x10] sm:$0x1f]
        %v251 = vld [vmem:[%s248 + $0x18] sm:$0x1f]
        %v252 = vmul.f32 %v199, -6.0
        %v253 = vmul.f32 %v200, -6.0
        %v254 = vmul.f32 %v201, -6.0
        %v258 = vrot.slane %v199, 1
        %v259 = vrot.slane %v200, 1
        %v260 = vrot.slane %v201, 1
        %v264 = vadd.f32 %v252, %v258
        %v265 = vadd.f32 %v253, %v259
        %v266 = vadd.f32 %v254, %v260
        %v267 = vrot.slane %v199, 7
        %v268 = vrot.slane %v200, 7
        %v269 = vrot.slane %v201, 7
        %v273 = vadd.f32 %v264, %v267
        %v274 = vadd.f32 %v265, %v268
        %v275 = vadd.f32 %v266, %v269
        %v276 = vadd.f32 %v273, %v200
        %v277 = vadd.f32 %v274, %v201
        %v278 = vadd.f32 %v275, %v202
        %v279 = vadd.f32 %v276, %v198
        %v280 = vadd.f32 %v277, %v199
        %v281 = vadd.f32 %v278, %v200
        %v282 = vadd.f32 %v279, %v249
        %v283 = vadd.f32 %v280, %v250
        %v284 = vadd.f32 %v281, %v251
        %v285 = vadd.f32 %v282, %v147
        %v286 = vadd.f32 %v283, %v148
        %v287 = vadd.f32 %v284, %v149
        %v288 = vmul.f32 %v285, %v285
        %v289 = vmul.f32 %v286, %v286
        %v290 = vmul.f32 %v287, %v287
        %v291 = vsel %vm190, %v288, 0.0
        %v292 = vsel %vm190, %v289, 0.0
        %v293 = vadd.f32 %v291, %v292
        %v294 = vsel %vm190, %v290, 0.0
        %v295 = vadd.f32 %v293, %v294
        %v296 = vadd.f32 %v247, %v295
        %v298 = vrot.slane %v296, 1
        %vm300 = vcmask 1042432
        %v301 = vsel %vm300, %v298, 0.0
        %v302 = vrot.slane %v301, 4
        %v303 = vadd.f32 %v301, %v302
        %v304 = vrot.slane %v303, 2
        %v305 = vadd.f32 %v303, %v304
        %v306 = vrot.slane %v305, 1
        %v307 = vadd.f32 %v305, %v306
        %v308 = vlaneseq
        %v309 = vshrl.u32 %v308, 7
        %vm310 = vcmp.eq.s32.totalorder %v309, 0
        %v311 = vsel %vm310, %v307, 0.0
        %312 = vst [vmem:[%s135] sm:$0xff] %v311
        %s313 = sand.u32 %s52, 1
        %s314 = scalar_lea.sflag [#allocation4], %s313
        %s315 = sand.u32 %s52, 1
        %s316 = smul.addr %s315, 8
        %s317 = scalar_lea.vmem [#allocation5], %s316
        // Predicated region
        $region29: #{tpu_custom_call.1} parent=23 // pred_check
          %p318 = pneg %p62
        $region30: #{tpu_custom_call.1} parent=23 // pred_check_branch
          %320 = sbr.rel (%p318) target = $region32
        $region31: #{tpu_custom_call.1} parent=23 // pred_region
          %322 = vsyncadd %s314, 0
          %s323 = smul.addr %s18, 8
          %s324 = scalar_lea.hbm %s1, %s323
          %s326 = sshll.u32 %s317, 4
          %s327 = int_to_ptr.vmem [resolvable:$true] %s326
          %s328 = sshll.u32 %s324, 4
          %s329 = int_to_ptr.hbm [resolvable:$true] %s328
          %331 = dma.vmem_to_hbm [thread:$0]  %s327, 128, %s329, %s314
        $region32: #{tpu_custom_call.1} parent=23 // pred_fallthru
          _
      $region24: #{tpu_custom_call.1} parent=5 // pred_fallthru
        _
      %p332 = scmp.le.s32.totalorder 2, %s13
      // Predicated region
      $region33: #{tpu_custom_call.1} parent=5 // pred_check
        %p333 = pneg %p332
      $region34: #{tpu_custom_call.1} parent=5 // pred_check_branch
        %335 = sbr.rel (%p333) target = $region36
      $region35: #{tpu_custom_call.1} parent=5 // pred_region
        %s336 = ssub.s32 %s13, 2
        // Predicated region
        $region37: #{tpu_custom_call.1} parent=35 // pred_check
          %p337 = pneg %p68
        $region38: #{tpu_custom_call.1} parent=35 // pred_check_branch
          %339 = sbr.rel (%p337) target = $region40
        $region39: #{tpu_custom_call.1} parent=35 // pred_region
          %s340 = sand.u32 %s53, 1
          %s341 = scalar_lea.sflag [#allocation4], %s340
          %s342 = sand.u32 %s53, 1
          %s343 = smul.addr %s342, 8
          %s344 = scalar_lea.vmem [#allocation5], %s343
          %346 = dma.done %s341, 128
        $region40: #{tpu_custom_call.1} parent=35 // pred_fallthru
          _
      $region36: #{tpu_custom_call.1} parent=5 // pred_fallthru
        _
    $region6: #{tpu_custom_call.1} parent=1 // loop_footer
      %s17 = sadd.s32 1, %s13
    $region7: #{tpu_custom_call.1} parent=1 // loop_footer_branch
      %12 = sbr.rel target = $region3
    $region8: #{tpu_custom_call.1} parent=1 // loop_exit
      _
    %347 = vsyncpa [#allocation3], 1
    %s348 = scalar_lea.sflag [#allocation3], 1
    %349 = vsyncpa %s348, 1
    %350 = vsyncpa [#allocation4], 1
    %s351 = scalar_lea.sflag [#allocation4], 1
    %352 = vsyncpa %s351, 1

</llo_original>
